<compile_context>
chip_gen: v5e
topology: v5e:2x2
jax: 0.10.0
libtpu: 0.0.40
codegen_flags: <defaults>
</compile_context>

<pallas_src>
import jax
import jax.numpy as jnp
from jax.experimental import pallas as pl
from jax.experimental.pallas import tpu as pltpu

HP = jax.lax.Precision.HIGHEST   # used only by the pure-JAX reference


def _split_bf16(x):
    """f32 -> (hi, lo) bf16 pair with hi + lo ~ x to ~16 mantissa bits."""
    hi = x.astype(jnp.bfloat16)
    lo = (x - hi.astype(jnp.float32)).astype(jnp.bfloat16)
    return hi, lo


def _mm3(a, b):
    """~Precision.HIGH matmul: 3 bf16 MXU passes (vs 6 for HIGHEST), ~f32 accurate."""
    a_hi, a_lo = _split_bf16(a)
    b_hi, b_lo = _split_bf16(b)
    return (jnp.dot(a_hi, b_hi, preferred_element_type=jnp.float32)
            + jnp.dot(a_hi, b_lo, preferred_element_type=jnp.float32)
            + jnp.dot(a_lo, b_hi, preferred_element_type=jnp.float32))


def kv_pos_kernel(prefix_ref, stacks_ref, tok_ref, emb_ref,
                  w1_ref, b1_ref, w2_ref, b2_ref, w3_ref, b3_ref, out_ref):
    """One grid step processes BB batch elements (folded into the matmul M dim)."""
    _, BB, S = stacks_ref.shape
    T = prefix_ref.shape[0]
    V, E = emb_ref.shape

    # --- signed one-hot of the stack symbols: [BB, S, V], values in {-1,0,+1} ---
    st = stacks_ref[0]                                              # [BB, S] i32
    sign = jnp.where(st < 0, -1.0, jnp.where(st == 0, 0.0, 1.0))    # [BB, S] f32
    mag = jnp.abs(st)                                               # [BB, S] i32
    iota_v = jax.lax.broadcasted_iota(jnp.int32, (BB, S, V), 2)
    onehot = jnp.where(mag[:, :, None] == iota_v, sign[:, :, None], 0.0)
    onehot = onehot.astype(jnp.bfloat16)                            # exact in bf16

    # --- fused cumsum + stride-2 slice via the shared [T, S] prefix matrix ----
    # prefix ({0,1}) and onehot ({-1,0,1}) are exact in bf16 and the f32
    # accumulator holds exact small integers, so one MXU pass per batch element
    # is exact.  Linear in BB (replaces v2's block-diagonal O(BB^2) matmul).
    pref = prefix_ref[...]                                          # [T, S] bf16
    counts = [jnp.dot(pref, onehot[b], preferred_element_type=jnp.float32)
              for b in range(BB)]                                   # BB x [T, V]
    counts = counts[0] if BB == 1 else jnp.concatenate(counts, axis=0)  # [BB*T, V]

    # counts are exact integers (|.| <= S <= 256, exact in bf16); only the
    # embedding table carries real-valued data -> hi/lo split, 2 passes.
    emb_hi, emb_lo = _split_bf16(emb_ref[...])
    c16 = counts.astype(jnp.bfloat16)
    pos_emb = (jnp.dot(c16, emb_hi, preferred_element_type=jnp.float32)
               + jnp.dot(c16, emb_lo, preferred_element_type=jnp.float32))  # [BB*T, E]

    tok = tok_ref[0].astype(jnp.float32)                            # [BB*T, E]

    # --- MLP; concat([pos_emb, tok]) @ W1 == pos_emb @ W1[:E] + tok @ W1[E:] ---
    h = _mm3(pos_emb, w1_ref[0:E, :]) + _mm3(tok, w1_ref[E:2 * E, :]) + b1_ref[...]
    h = jnp.maximum(h, 0.0)
    h = _mm3(h, w2_ref[...]) + b2_ref[...]
    h = jnp.maximum(h, 0.0)
    out = _mm3(h, w3_ref[...]) + b3_ref[...]
    out_ref[0] = out.astype(out_ref.dtype)


def key_value_position_encoding(tok_emb, stacks, params, *, batch_block=None):
    """tok_emb: [B, T, E] f32, stacks: [B, S] int with S == 2*T."""
    emb, w1, b1, w2, b2, w3, b3 = params
    B, T, E = tok_emb.shape
    S = stacks.shape[1]
    assert S == 2 * T, "stacks must carry 2 symbols per token position"

    if batch_block is None:
        # >= 2 grid steps so the BlockSpec pipeline overlaps input DMA and
        # output writeback with MXU work, while keeping the per-step matmul M
        # dimension (BB*T) reasonably large.  Constant-index operands (weights,
        # emb, prefix) are not re-fetched across steps.
        bb = max(1, min(B // 2, max(1, 512 // T)))
        while B % bb:
            bb -= 1
        batch_block = bb
    assert B % batch_block == 0, "batch_block must divide the batch size"
    BB = batch_block
    steps = B // BB
    BBT = BB * T

    # Shared fused "cumsum(dim=1) + [:, 0:-1:2, :]" operator, built once on the
    # host: prefix[t, j] = 1 iff stack column j <= 2*t.  Exact in bf16.
    prefix = (jnp.arange(S, dtype=jnp.int32)[None, :]
              <= 2 * jnp.arange(T, dtype=jnp.int32)[:, None]).astype(jnp.bfloat16)

    stacks3 = stacks.reshape(steps, BB, S).astype(jnp.int32)   # lane-dense rows
    tok3 = tok_emb.reshape(steps, BBT, E)                      # contiguous slabs

    def full(arr):
        return pl.BlockSpec(arr.shape, lambda i: (0,) * arr.ndim)

    out = pl.pallas_call(
        kv_pos_kernel,
        out_shape=jax.ShapeDtypeStruct((steps, BBT, E), tok_emb.dtype),
        grid=(steps,),
        in_specs=[
            full(prefix),                                      # [T, S] prefix
            pl.BlockSpec((1, BB, S), lambda i: (i, 0, 0)),     # stack symbols
            pl.BlockSpec((1, BBT, E), lambda i: (i, 0, 0)),    # token embeddings
            full(emb), full(w1), full(b1),
            full(w2), full(b2), full(w3), full(b3),
        ],
        out_specs=pl.BlockSpec((1, BBT, E), lambda i: (i, 0, 0)),
        compiler_params=pltpu.CompilerParams(
            dimension_semantics=("parallel",)),
    )(prefix, stacks3, tok3, emb, w1, b1, w2, b2, w3, b3)
    return out.reshape(B, T, E)


def reference(tok_emb, stacks, emb, w1, b1, w2, b2, w3, b3):
    """Pure-JAX mirror of the PyTorch forward (full f32 precision)."""
    e = emb[jnp.abs(stacks)]                                        # [B, S, E]
    sign = jnp.where(stacks < 0, -1.0, jnp.where(stacks == 0, 0.0, 1.0))
    e = e * sign[..., None]
    c = jnp.cumsum(e, axis=1)
    pos = c[:, 0:-1:2, :]                                           # [B, T, E]
    x = jnp.concatenate([pos, tok_emb], axis=-1)                    # [B, T, 2E]
    h = jnp.maximum(jnp.matmul(x, w1, precision=HP) + b1[0], 0.0)
    h = jnp.maximum(jnp.matmul(h, w2, precision=HP) + b2[0], 0.0)
    return jnp.matmul(h, w3, precision=HP) + b3[0]


if __name__ == "__main__":
    B, T, E, V = 2, 8, 32, 12          # batch, tokens, embedding_dim, num_embeddings
    S = 2 * T

    key = jax.random.PRNGKey(0)
    ks = jax.random.split(key, 6)

    tok_emb = jax.random.normal(ks[0], (B, T, E), dtype=jnp.float32)
    stacks = jax.random.randint(ks[1], (B, S), -(V - 1), V, dtype=jnp.int32)

    # nn.Embedding(num_embeddings, embedding_dim, padding_idx=0): N(0,1), row 0 zeroed
    emb = jax.random.normal(ks[2], (V, E), dtype=jnp.float32)
    emb = emb.at[0].set(0.0)

    def linear_init(k, fan_in, fan_out):
        kw, kb = jax.random.split(k)
        bound = 1.0 / (fan_in ** 0.5)
        w = jax.random.uniform(kw, (fan_in, fan_out), jnp.float32, -bound, bound)
        b = jax.random.uniform(kb, (1, fan_out), jnp.float32, -bound, bound)
        return w, b

    # fuse_mlp: Linear(2E,2E) ReLU Linear(2E,4E) ReLU Linear(4E,E)
    w1, b1 = linear_init(ks[3], 2 * E, 2 * E)
    w2, b2 = linear_init(ks[4], 2 * E, 4 * E)
    w3, b3 = linear_init(ks[5], 4 * E, 1 * E)
    params = (emb, w1, b1, w2, b2, w3, b3)

    out = key_value_position_encoding(tok_emb, stacks, params)
    out = jax.block_until_ready(out)

    ref = reference(tok_emb, stacks, emb, w1, b1, w2, b2, w3, b3)
    assert out.shape == (B, T, E) and out.dtype == jnp.float32
    err = float(jnp.max(jnp.abs(out - ref)))
    assert jnp.allclose(out, ref, rtol=1e-3, atol=1e-3), f"max abs err {err}"
    print("KERNEL_OK")
</pallas_src>

<mosaic_0001>
module attributes {stable_mosaic.version = 11 : i64} {
  func.func @kv_pos_kernel(%arg0: i32, %arg1: memref<8x16xbf16, #tpu.memory_space<vmem>>, %arg2: memref<1x1x16xi32, #tpu.memory_space<vmem>>, %arg3: memref<1x8x32xf32, #tpu.memory_space<vmem>>, %arg4: memref<12x32xf32, #tpu.memory_space<vmem>>, %arg5: memref<64x64xf32, #tpu.memory_space<vmem>>, %arg6: memref<1x64xf32, #tpu.memory_space<vmem>>, %arg7: memref<64x128xf32, #tpu.memory_space<vmem>>, %arg8: memref<1x128xf32, #tpu.memory_space<vmem>>, %arg9: memref<128x32xf32, #tpu.memory_space<vmem>>, %arg10: memref<1x32xf32, #tpu.memory_space<vmem>>, %arg11: memref<1x8x32xf32, #tpu.memory_space<vmem>>) attributes {dimension_semantics = [#tpu.dimension_semantics<parallel>], iteration_bounds = array<i64: 2>, scalar_prefetch = 0 : i64, scratch_operands = 0 : i64, tpu.core_type = #tpu.core_type<tc>, window_params = [{pipeline_mode = #tpu.pipeline_mode<synchronous>, transform_indices = @transform_0, window_bounds = array<i64: 8, 16>}, {transform_indices = @transform_1, window_bounds = array<i64: 1, 1, 16>}, {transform_indices = @transform_2, window_bounds = array<i64: 1, 8, 32>}, {pipeline_mode = #tpu.pipeline_mode<synchronous>, transform_indices = @transform_3, window_bounds = array<i64: 12, 32>}, {pipeline_mode = #tpu.pipeline_mode<synchronous>, transform_indices = @transform_4, window_bounds = array<i64: 64, 64>}, {pipeline_mode = #tpu.pipeline_mode<synchronous>, transform_indices = @transform_5, window_bounds = array<i64: 1, 64>}, {pipeline_mode = #tpu.pipeline_mode<synchronous>, transform_indices = @transform_6, window_bounds = array<i64: 64, 128>}, {pipeline_mode = #tpu.pipeline_mode<synchronous>, transform_indices = @transform_7, window_bounds = array<i64: 1, 128>}, {pipeline_mode = #tpu.pipeline_mode<synchronous>, transform_indices = @transform_8, window_bounds = array<i64: 128, 32>}, {pipeline_mode = #tpu.pipeline_mode<synchronous>, transform_indices = @transform_9, window_bounds = array<i64: 1, 32>}, {transform_indices = @transform_10, window_bounds = array<i64: 1, 8, 32>}]} {
    %c0 = arith.constant 0 : index
    %c0_0 = arith.constant 0 : index
    %c0_1 = arith.constant 0 : index
    %0 = vector.load %arg2[%c0, %c0_0, %c0_1] : memref<1x1x16xi32, #tpu.memory_space<vmem>>, vector<1x1x16xi32>
    %1 = vector.shape_cast %0 : vector<1x1x16xi32> to vector<1x16xi32>
    %c0_i32 = arith.constant 0 : i32
    %2 = vector.broadcast %c0_i32 : i32 to vector<1x16xi32>
    %3 = arith.cmpi slt, %1, %2 : vector<1x16xi32>
    %c0_i32_2 = arith.constant 0 : i32
    %4 = vector.broadcast %c0_i32_2 : i32 to vector<1x16xi32>
    %5 = arith.cmpi eq, %1, %4 : vector<1x16xi32>
    %cst = arith.constant 0.000000e+00 : f32
    %cst_3 = arith.constant 1.000000e+00 : f32
    %6 = vector.broadcast %cst : f32 to vector<1x16xf32>
    %7 = vector.broadcast %cst_3 : f32 to vector<1x16xf32>
    %8 = arith.select %5, %6, %7 : vector<1x16xi1>, vector<1x16xf32>
    %cst_4 = arith.constant -1.000000e+00 : f32
    %9 = vector.broadcast %cst_4 : f32 to vector<1x16xf32>
    %10 = arith.select %3, %9, %8 : vector<1x16xi1>, vector<1x16xf32>
    %11 = math.absi %1 : vector<1x16xi32>
    %12 = tpu.iota {dimensions = array<i32: 2>} : vector<1x16x12xi32>
    %13 = vector.shape_cast %11 : vector<1x16xi32> to vector<1x16x1xi32>
    %14 = vector.broadcast %13 : vector<1x16x1xi32> to vector<1x16x12xi32>
    %15 = arith.cmpi eq, %14, %12 : vector<1x16x12xi32>
    %16 = vector.shape_cast %10 : vector<1x16xf32> to vector<1x16x1xf32>
    %cst_5 = arith.constant 0.000000e+00 : f32
    %17 = vector.shape_cast %16 : vector<1x16x1xf32> to vector<1x16x1xf32>
    %18 = vector.broadcast %17 : vector<1x16x1xf32> to vector<1x16x12xf32>
    %19 = vector.broadcast %cst_5 : f32 to vector<1x16x12xf32>
    %20 = arith.select %15, %18, %19 : vector<1x16x12xi1>, vector<1x16x12xf32>
    %21 = arith.truncf %20 : vector<1x16x12xf32> to vector<1x16x12xbf16>
    %c0_6 = arith.constant 0 : index
    %c0_7 = arith.constant 0 : index
    %22 = vector.load %arg1[%c0_6, %c0_7] : memref<8x16xbf16, #tpu.memory_space<vmem>>, vector<8x16xbf16>
    %23 = vector.shape_cast %21 : vector<1x16x12xbf16> to vector<16x12xbf16>
    %cst_8 = arith.constant dense<0.000000e+00> : vector<8x12xf32>
    %24 = tpu.matmul %22, %23, %cst_8 {dimension_numbers = #tpu.dot_dimension_numbers<[1], [0], [0], [1], [0, 0, 1, 1], [], []>} : vector<8x16xbf16>, vector<16x12xbf16>, vector<8x12xf32> -> vector<8x12xf32>
    %c0_9 = arith.constant 0 : index
    %c0_10 = arith.constant 0 : index
    %25 = vector.load %arg4[%c0_9, %c0_10] : memref<12x32xf32, #tpu.memory_space<vmem>>, vector<12x32xf32>
    %26 = arith.truncf %25 : vector<12x32xf32> to vector<12x32xbf16>
    %27 = arith.extf %26 : vector<12x32xbf16> to vector<12x32xf32>
    %28 = arith.subf %25, %27 : vector<12x32xf32>
    %29 = arith.truncf %28 : vector<12x32xf32> to vector<12x32xbf16>
    %30 = arith.truncf %24 : vector<8x12xf32> to vector<8x12xbf16>
    %cst_11 = arith.constant dense<0.000000e+00> : vector<8x32xf32>
    %31 = tpu.matmul %30, %26, %cst_11 {dimension_numbers = #tpu.dot_dimension_numbers<[1], [0], [0], [1], [0, 0, 1, 1], [], []>} : vector<8x12xbf16>, vector<12x32xbf16>, vector<8x32xf32> -> vector<8x32xf32>
    %cst_12 = arith.constant dense<0.000000e+00> : vector<8x32xf32>
    %32 = tpu.matmul %30, %29, %cst_12 {dimension_numbers = #tpu.dot_dimension_numbers<[1], [0], [0], [1], [0, 0, 1, 1], [], []>} : vector<8x12xbf16>, vector<12x32xbf16>, vector<8x32xf32> -> vector<8x32xf32>
    %33 = arith.addf %31, %32 : vector<8x32xf32>
    %c0_13 = arith.constant 0 : index
    %c0_14 = arith.constant 0 : index
    %c0_15 = arith.constant 0 : index
    %34 = vector.load %arg3[%c0_13, %c0_14, %c0_15] : memref<1x8x32xf32, #tpu.memory_space<vmem>>, vector<1x8x32xf32>
    %35 = vector.shape_cast %34 : vector<1x8x32xf32> to vector<8x32xf32>
    %c0_16 = arith.constant 0 : index
    %c0_17 = arith.constant 0 : index
    %36 = vector.load %arg5[%c0_16, %c0_17] : memref<64x64xf32, #tpu.memory_space<vmem>>, vector<32x64xf32>
    %37 = arith.truncf %33 : vector<8x32xf32> to vector<8x32xbf16>
    %38 = arith.extf %37 : vector<8x32xbf16> to vector<8x32xf32>
    %39 = arith.subf %33, %38 : vector<8x32xf32>
    %40 = arith.truncf %39 : vector<8x32xf32> to vector<8x32xbf16>
    %41 = arith.truncf %36 : vector<32x64xf32> to vector<32x64xbf16>
    %42 = arith.extf %41 : vector<32x64xbf16> to vector<32x64xf32>
    %43 = arith.subf %36, %42 : vector<32x64xf32>
    %44 = arith.truncf %43 : vector<32x64xf32> to vector<32x64xbf16>
    %cst_18 = arith.constant dense<0.000000e+00> : vector<8x64xf32>
    %45 = tpu.matmul %37, %41, %cst_18 {dimension_numbers = #tpu.dot_dimension_numbers<[1], [0], [0], [1], [0, 0, 1, 1], [], []>} : vector<8x32xbf16>, vector<32x64xbf16>, vector<8x64xf32> -> vector<8x64xf32>
    %cst_19 = arith.constant dense<0.000000e+00> : vector<8x64xf32>
    %46 = tpu.matmul %37, %44, %cst_19 {dimension_numbers = #tpu.dot_dimension_numbers<[1], [0], [0], [1], [0, 0, 1, 1], [], []>} : vector<8x32xbf16>, vector<32x64xbf16>, vector<8x64xf32> -> vector<8x64xf32>
    %47 = arith.addf %45, %46 : vector<8x64xf32>
    %cst_20 = arith.constant dense<0.000000e+00> : vector<8x64xf32>
    %48 = tpu.matmul %40, %41, %cst_20 {dimension_numbers = #tpu.dot_dimension_numbers<[1], [0], [0], [1], [0, 0, 1, 1], [], []>} : vector<8x32xbf16>, vector<32x64xbf16>, vector<8x64xf32> -> vector<8x64xf32>
    %49 = arith.addf %47, %48 : vector<8x64xf32>
    %c32 = arith.constant 32 : index
    %c0_21 = arith.constant 0 : index
    %50 = vector.load %arg5[%c32, %c0_21] : memref<64x64xf32, #tpu.memory_space<vmem>>, vector<32x64xf32>
    %51 = arith.truncf %35 : vector<8x32xf32> to vector<8x32xbf16>
    %52 = arith.extf %51 : vector<8x32xbf16> to vector<8x32xf32>
    %53 = arith.subf %35, %52 : vector<8x32xf32>
    %54 = arith.truncf %53 : vector<8x32xf32> to vector<8x32xbf16>
    %55 = arith.truncf %50 : vector<32x64xf32> to vector<32x64xbf16>
    %56 = arith.extf %55 : vector<32x64xbf16> to vector<32x64xf32>
    %57 = arith.subf %50, %56 : vector<32x64xf32>
    %58 = arith.truncf %57 : vector<32x64xf32> to vector<32x64xbf16>
    %cst_22 = arith.constant dense<0.000000e+00> : vector<8x64xf32>
    %59 = tpu.matmul %51, %55, %cst_22 {dimension_numbers = #tpu.dot_dimension_numbers<[1], [0], [0], [1], [0, 0, 1, 1], [], []>} : vector<8x32xbf16>, vector<32x64xbf16>, vector<8x64xf32> -> vector<8x64xf32>
    %cst_23 = arith.constant dense<0.000000e+00> : vector<8x64xf32>
    %60 = tpu.matmul %51, %58, %cst_23 {dimension_numbers = #tpu.dot_dimension_numbers<[1], [0], [0], [1], [0, 0, 1, 1], [], []>} : vector<8x32xbf16>, vector<32x64xbf16>, vector<8x64xf32> -> vector<8x64xf32>
    %61 = arith.addf %59, %60 : vector<8x64xf32>
    %cst_24 = arith.constant dense<0.000000e+00> : vector<8x64xf32>
    %62 = tpu.matmul %54, %55, %cst_24 {dimension_numbers = #tpu.dot_dimension_numbers<[1], [0], [0], [1], [0, 0, 1, 1], [], []>} : vector<8x32xbf16>, vector<32x64xbf16>, vector<8x64xf32> -> vector<8x64xf32>
    %63 = arith.addf %61, %62 : vector<8x64xf32>
    %64 = arith.addf %49, %63 : vector<8x64xf32>
    %c0_25 = arith.constant 0 : index
    %c0_26 = arith.constant 0 : index
    %65 = vector.load %arg6[%c0_25, %c0_26] : memref<1x64xf32, #tpu.memory_space<vmem>>, vector<1x64xf32>
    %66 = vector.broadcast %65 : vector<1x64xf32> to vector<8x64xf32>
    %67 = arith.addf %64, %66 : vector<8x64xf32>
    %cst_27 = arith.constant 0.000000e+00 : f32
    %68 = vector.broadcast %cst_27 : f32 to vector<8x64xf32>
    %69 = arith.maximumf %67, %68 : vector<8x64xf32>
    %c0_28 = arith.constant 0 : index
    %c0_29 = arith.constant 0 : index
    %70 = vector.load %arg7[%c0_28, %c0_29] : memref<64x128xf32, #tpu.memory_space<vmem>>, vector<64x128xf32>
    %71 = arith.truncf %69 : vector<8x64xf32> to vector<8x64xbf16>
    %72 = arith.extf %71 : vector<8x64xbf16> to vector<8x64xf32>
    %73 = arith.subf %69, %72 : vector<8x64xf32>
    %74 = arith.truncf %73 : vector<8x64xf32> to vector<8x64xbf16>
    %75 = arith.truncf %70 : vector<64x128xf32> to vector<64x128xbf16>
    %76 = arith.extf %75 : vector<64x128xbf16> to vector<64x128xf32>
    %77 = arith.subf %70, %76 : vector<64x128xf32>
    %78 = arith.truncf %77 : vector<64x128xf32> to vector<64x128xbf16>
    %cst_30 = arith.constant dense<0.000000e+00> : vector<8x128xf32>
    %79 = tpu.matmul %71, %75, %cst_30 {dimension_numbers = #tpu.dot_dimension_numbers<[1], [0], [0], [1], [0, 0, 1, 1], [], []>} : vector<8x64xbf16>, vector<64x128xbf16>, vector<8x128xf32> -> vector<8x128xf32>
    %cst_31 = arith.constant dense<0.000000e+00> : vector<8x128xf32>
    %80 = tpu.matmul %71, %78, %cst_31 {dimension_numbers = #tpu.dot_dimension_numbers<[1], [0], [0], [1], [0, 0, 1, 1], [], []>} : vector<8x64xbf16>, vector<64x128xbf16>, vector<8x128xf32> -> vector<8x128xf32>
    %81 = arith.addf %79, %80 : vector<8x128xf32>
    %cst_32 = arith.constant dense<0.000000e+00> : vector<8x128xf32>
    %82 = tpu.matmul %74, %75, %cst_32 {dimension_numbers = #tpu.dot_dimension_numbers<[1], [0], [0], [1], [0, 0, 1, 1], [], []>} : vector<8x64xbf16>, vector<64x128xbf16>, vector<8x128xf32> -> vector<8x128xf32>
    %83 = arith.addf %81, %82 : vector<8x128xf32>
    %c0_33 = arith.constant 0 : index
    %c0_34 = arith.constant 0 : index
    %84 = vector.load %arg8[%c0_33, %c0_34] : memref<1x128xf32, #tpu.memory_space<vmem>>, vector<1x128xf32>
    %85 = vector.broadcast %84 : vector<1x128xf32> to vector<8x128xf32>
    %86 = arith.addf %83, %85 : vector<8x128xf32>
    %cst_35 = arith.constant 0.000000e+00 : f32
    %87 = vector.broadcast %cst_35 : f32 to vector<8x128xf32>
    %88 = arith.maximumf %86, %87 : vector<8x128xf32>
    %c0_36 = arith.constant 0 : index
    %c0_37 = arith.constant 0 : index
    %89 = vector.load %arg9[%c0_36, %c0_37] : memref<128x32xf32, #tpu.memory_space<vmem>>, vector<128x32xf32>
    %90 = arith.truncf %88 : vector<8x128xf32> to vector<8x128xbf16>
    %91 = arith.extf %90 : vector<8x128xbf16> to vector<8x128xf32>
    %92 = arith.subf %88, %91 : vector<8x128xf32>
    %93 = arith.truncf %92 : vector<8x128xf32> to vector<8x128xbf16>
    %94 = arith.truncf %89 : vector<128x32xf32> to vector<128x32xbf16>
    %95 = arith.extf %94 : vector<128x32xbf16> to vector<128x32xf32>
    %96 = arith.subf %89, %95 : vector<128x32xf32>
    %97 = arith.truncf %96 : vector<128x32xf32> to vector<128x32xbf16>
    %cst_38 = arith.constant dense<0.000000e+00> : vector<8x32xf32>
    %98 = tpu.matmul %90, %94, %cst_38 {dimension_numbers = #tpu.dot_dimension_numbers<[1], [0], [0], [1], [0, 0, 1, 1], [], []>} : vector<8x128xbf16>, vector<128x32xbf16>, vector<8x32xf32> -> vector<8x32xf32>
    %cst_39 = arith.constant dense<0.000000e+00> : vector<8x32xf32>
    %99 = tpu.matmul %90, %97, %cst_39 {dimension_numbers = #tpu.dot_dimension_numbers<[1], [0], [0], [1], [0, 0, 1, 1], [], []>} : vector<8x128xbf16>, vector<128x32xbf16>, vector<8x32xf32> -> vector<8x32xf32>
    %100 = arith.addf %98, %99 : vector<8x32xf32>
    %cst_40 = arith.constant dense<0.000000e+00> : vector<8x32xf32>
    %101 = tpu.matmul %93, %94, %cst_40 {dimension_numbers = #tpu.dot_dimension_numbers<[1], [0], [0], [1], [0, 0, 1, 1], [], []>} : vector<8x128xbf16>, vector<128x32xbf16>, vector<8x32xf32> -> vector<8x32xf32>
    %102 = arith.addf %100, %101 : vector<8x32xf32>
    %c0_41 = arith.constant 0 : index
    %c0_42 = arith.constant 0 : index
    %103 = vector.load %arg10[%c0_41, %c0_42] : memref<1x32xf32, #tpu.memory_space<vmem>>, vector<1x32xf32>
    %104 = vector.broadcast %103 : vector<1x32xf32> to vector<8x32xf32>
    %105 = arith.addf %102, %104 : vector<8x32xf32>
    %c0_43 = arith.constant 0 : index
    %c0_44 = arith.constant 0 : index
    %c0_45 = arith.constant 0 : index
    %106 = vector.load %arg11[%c0_43, %c0_44, %c0_45] : memref<1x8x32xf32, #tpu.memory_space<vmem>>, vector<1x8x32xf32>
    %107 = vector.shape_cast %106 : vector<1x8x32xf32> to vector<8x32xf32>
    %108 = vector.shape_cast %105 : vector<8x32xf32> to vector<1x8x32xf32>
    tpu.vector_store %arg11[%c0_43, %c0_44, %c0_45], %108 {strides = array<i32>} : memref<1x8x32xf32, #tpu.memory_space<vmem>>, vector<1x8x32xf32>,
    return
  }
  func.func @transform_0(%arg0: i32) -> (i32, i32) {
    %c0_i32 = arith.constant 0 : i32
    %c0_i32_0 = arith.constant 0 : i32
    %c0_i32_1 = arith.constant 0 : i32
    return %c0_i32, %c0_i32_0 : i32, i32
  }
  func.func @transform_1(%arg0: i32) -> (i32, i32, i32) {
    %c0_i32 = arith.constant 0 : i32
    %c0_i32_0 = arith.constant 0 : i32
    %c0_i32_1 = arith.constant 0 : i32
    return %arg0, %c0_i32, %c0_i32_0 : i32, i32, i32
  }
  func.func @transform_2(%arg0: i32) -> (i32, i32, i32) {
    %c0_i32 = arith.constant 0 : i32
    %c0_i32_0 = arith.constant 0 : i32
    %c0_i32_1 = arith.constant 0 : i32
    return %arg0, %c0_i32, %c0_i32_0 : i32, i32, i32
  }
  func.func @transform_3(%arg0: i32) -> (i32, i32) {
    %c0_i32 = arith.constant 0 : i32
    %c0_i32_0 = arith.constant 0 : i32
    %c0_i32_1 = arith.constant 0 : i32
    return %c0_i32, %c0_i32_0 : i32, i32
  }
  func.func @transform_4(%arg0: i32) -> (i32, i32) {
    %c0_i32 = arith.constant 0 : i32
    %c0_i32_0 = arith.constant 0 : i32
    %c0_i32_1 = arith.constant 0 : i32
    return %c0_i32, %c0_i32_0 : i32, i32
  }
  func.func @transform_5(%arg0: i32) -> (i32, i32) {
    %c0_i32 = arith.constant 0 : i32
    %c0_i32_0 = arith.constant 0 : i32
    %c0_i32_1 = arith.constant 0 : i32
    return %c0_i32, %c0_i32_0 : i32, i32
  }
  func.func @transform_6(%arg0: i32) -> (i32, i32) {
    %c0_i32 = arith.constant 0 : i32
    %c0_i32_0 = arith.constant 0 : i32
    %c0_i32_1 = arith.constant 0 : i32
    return %c0_i32, %c0_i32_0 : i32, i32
  }
  func.func @transform_7(%arg0: i32) -> (i32, i32) {
    %c0_i32 = arith.constant 0 : i32
    %c0_i32_0 = arith.constant 0 : i32
    %c0_i32_1 = arith.constant 0 : i32
    return %c0_i32, %c0_i32_0 : i32, i32
  }
  func.func @transform_8(%arg0: i32) -> (i32, i32) {
    %c0_i32 = arith.constant 0 : i32
    %c0_i32_0 = arith.constant 0 : i32
    %c0_i32_1 = arith.constant 0 : i32
    return %c0_i32, %c0_i32_0 : i32, i32
  }
  func.func @transform_9(%arg0: i32) -> (i32, i32) {
    %c0_i32 = arith.constant 0 : i32
    %c0_i32_0 = arith.constant 0 : i32
    %c0_i32_1 = arith.constant 0 : i32
    return %c0_i32, %c0_i32_0 : i32, i32
  }
  func.func @transform_10(%arg0: i32) -> (i32, i32, i32) {
    %c0_i32 = arith.constant 0 : i32
    %c0_i32_0 = arith.constant 0 : i32
    %c0_i32_1 = arith.constant 0 : i32
    return %arg0, %c0_i32, %c0_i32_0 : i32, i32, i32
  }
}

</mosaic_0001>

<llo_original>
// kernel: tpu_custom_call.1
$region0: #{tpu_custom_call.1}
  #allocation0 [shape = 'u32[]', space=smem, size = 0x4, offset = 0x4, fixed_abs, tag = 'smem constant byte address 0x4 - core index']
  #allocation1 [shape = 'u32[72,128]{1,0:T(1,128)}', space=vmem, size = 0x9000, scoped, tag = 'internal scratch']
  %s0 = inlined_call_operand.hbm [shape: bf16[8,16], index: 0, kind: input, shape index: {}]
  %s1 = inlined_call_operand.hbm [shape: s32[2,1,16], index: 1, kind: input, shape index: {}]
  %s2 = inlined_call_operand.vmem [shape: f32[2,8,32], index: 2, kind: input, shape index: {}]
  %s3 = inlined_call_operand.vmem [shape: f32[12,32], index: 3, kind: input, shape index: {}]
  %s4 = inlined_call_operand.vmem [shape: f32[64,64], index: 4, kind: input, shape index: {}]
  %s5 = inlined_call_operand.vmem [shape: f32[1,64], index: 5, kind: input, shape index: {}]
  %s6 = inlined_call_operand.vmem [shape: f32[64,128], index: 6, kind: input, shape index: {}]
  %s7 = inlined_call_operand.vmem [shape: f32[1,128], index: 7, kind: input, shape index: {}]
  %s8 = inlined_call_operand.vmem [shape: f32[128,32], index: 8, kind: input, shape index: {}]
  %s9 = inlined_call_operand.vmem [shape: f32[1,32], index: 9, kind: input, shape index: {}]
  %s10 = inlined_call_operand.hbm [shape: f32[2,8,32], index: 10, kind: output, shape index: {}]
  %s11 = sld [smem:[#allocation0]]
  $region81: #{tpu_custom_call.1} parent=0
    _
  %s13 = ssub.s32 1, %s11
  %s14 = scalar_select 0, %s13, %s11
  $region1: #{tpu_custom_call.1} parent=0
    #allocation2 [shape = 'u8[2048]{0}', space=vmem, size = 0x800, scoped, tag = 'input window, operand 0, single buffered']
    #allocation3 [shape = 's32[2]{0}', space=sflag, size = 0x8, scoped, tag = 'scoped memory for tpu_custom_call.1']
    #allocation4 [shape = 's32[2]{0}', space=sflag, size = 0x8, scoped, tag = 'scoped memory for tpu_custom_call.1']
    #allocation5 [shape = 'u8[1024]{0}', space=vmem, size = 0x400, scoped, tag = 'input window, operand 1']
    #allocation6 [shape = 's32[2]{0}', space=sflag, size = 0x8, scoped, tag = 'scoped memory for tpu_custom_call.1']
    #allocation7 [shape = 'u8[8192]{0}', space=vmem, size = 0x2000, scoped, tag = 'output window, operand 0']
    %15 = vsyncpa [#allocation3], 0
    %16 = vsyncpa [#allocation6], 0
    %s17 = scalar_lea.sflag [#allocation6], 1
    %18 = vsyncpa %s17, 0
    %19 = vsyncpa [#allocation4], 0
    %s20 = scalar_lea.sflag [#allocation4], 1
    %21 = vsyncpa %s20, 0
    loop: start=0, step=1, limit=4
    $region2: #{tpu_custom_call.1} parent=1 // loop_pre_header
      _
    $region3: #{tpu_custom_call.1} parent=1 // loop_header
      %s23 = sphi 0, %s27
      %p24 = scmp.ge.s32.totalorder %s23, 4
      %s31 = sphi 0, %s31
      %s33 = sphi 0, %s31
      %s34 = sphi 0, %s33
      %s48 = sphi 0, %s34
      %s54 = sphi 0, %s56
      %s57 = sphi 0, %s54
      %s58 = sphi 0, %s57
      %s74 = sphi 0, %s58
      %s80 = sphi 0, %s82
      %s83 = sphi 0, %s80
      %s84 = sphi 0, %s83
      %s100 = sphi 0, %s84
      %s104 = sphi 0, %s104
      %s106 = sphi 0, %s104
      %s107 = sphi 0, %s106
      %s121 = sphi 0, %s107
      %s125 = sphi 0, %s125
      %s127 = sphi 0, %s125
      %s128 = sphi 0, %s127
      %s142 = sphi 0, %s128
      %s146 = sphi 0, %s146
      %s148 = sphi 0, %s146
      %s149 = sphi 0, %s148
      %s163 = sphi 0, %s149
      %s167 = sphi 0, %s167
      %s169 = sphi 0, %s167
      %s170 = sphi 0, %s169
      %s184 = sphi 0, %s170
      %s188 = sphi 0, %s188
      %s190 = sphi 0, %s188
      %s191 = sphi 0, %s190
      %s205 = sphi 0, %s191
      %s209 = sphi 0, %s209
      %s211 = sphi 0, %s209
      %s212 = sphi 0, %s211
      %s226 = sphi 0, %s212
      %s230 = sphi 0, %s230
      %s232 = sphi 0, %s230
      %s233 = sphi 0, %s232
      %s247 = sphi 0, %s233
      %s253 = sphi 0, %s255
      %s256 = sphi 0, %s253
      %s257 = sphi 0, %s256
      %s273 = sphi 0, %s257
    $region4: #{tpu_custom_call.1} parent=1 // loop_header_branch
      %26 = sbr.rel (%p24) target = $region8
    $region5: #{tpu_custom_call.1} parent=1 // loop_body
      %s28 = ssub.s32 %s23, 1
      %s29 = ssub.s32 %s23, 2
      %s30 = sadd.s32 %s23, 1
      %s32 = sadd.s32 %s31, 1
      %p35 = scmp.eq.s32.totalorder %s23, 1
      %p36 = scmp.ne.s32.totalorder %s31, %s33
      %p37 = scmp.eq.s32.totalorder %s23, 0
      %p38 = por %p36, %p37
      %p39 = scmp.ne.s32.totalorder %s31, %s33
      %p40 = scmp.eq.s32.totalorder %s28, 1
      %p41 = por %p39, %p40
      %p42 = scmp.ne.s32.totalorder %s33, %s34
      %p43 = scmp.eq.s32.totalorder %s28, 0
      %p44 = por %p42, %p43
      %p45 = scmp.ne.s32.totalorder %s33, %s34
      %p46 = scmp.eq.s32.totalorder %s29, 1
      %p47 = por %p45, %p46
      %p49 = scmp.ne.s32.totalorder %s34, %s48
      %p50 = scmp.eq.s32.totalorder %s29, 0
      %p51 = por %p49, %p50
      %s52 = ssub.s32 %s23, %s30
      %p53 = scmp.eq.s32.totalorder %s52, 0
      %s55 = sadd.s32 %s54, 1
      %s56 = scalar_select %p53, %s54, %s55
      %p59 = pneg %p53
      %p60 = scmp.eq.s32.totalorder %s23, 1
      %p61 = por %p59, %p60
      %p62 = scmp.ne.s32.totalorder %s54, %s57
      %p63 = scmp.eq.s32.totalorder %s23, 0
      %p64 = por %p62, %p63
      %p65 = scmp.ne.s32.totalorder %s54, %s57
      %p66 = scmp.eq.s32.totalorder %s28, 1
      %p67 = por %p65, %p66
      %p68 = scmp.ne.s32.totalorder %s57, %s58
      %p69 = scmp.eq.s32.totalorder %s28, 0
      %p70 = por %p68, %p69
      %p71 = scmp.ne.s32.totalorder %s57, %s58
      %p72 = scmp.eq.s32.totalorder %s29, 1
      %p73 = por %p71, %p72
      %p75 = scmp.ne.s32.totalorder %s58, %s74
      %p76 = scmp.eq.s32.totalorder %s29, 0
      %p77 = por %p75, %p76
      %s78 = ssub.s32 %s23, %s30
      %p79 = scmp.eq.s32.totalorder %s78, 0
      %s81 = sadd.s32 %s80, 1
      %s82 = scalar_select %p79, %s80, %s81
      %p85 = pneg %p79
      %p86 = scmp.eq.s32.totalorder %s23, 1
      %p87 = por %p85, %p86
      %p88 = scmp.ne.s32.totalorder %s80, %s83
      %p89 = scmp.eq.s32.totalorder %s23, 0
      %p90 = por %p88, %p89
      %p91 = scmp.ne.s32.totalorder %s80, %s83
      %p92 = scmp.eq.s32.totalorder %s28, 1
      %p93 = por %p91, %p92
      %p94 = scmp.ne.s32.totalorder %s83, %s84
      %p95 = scmp.eq.s32.totalorder %s28, 0
      %p96 = por %p94, %p95
      %p97 = scmp.ne.s32.totalorder %s83, %s84
      %p98 = scmp.eq.s32.totalorder %s29, 1
      %p99 = por %p97, %p98
      %p101 = scmp.ne.s32.totalorder %s84, %s100
      %p102 = scmp.eq.s32.totalorder %s29, 0
      %p103 = por %p101, %p102
      %s105 = sadd.s32 %s104, 1
      %p108 = scmp.eq.s32.totalorder %s23, 1
      %p109 = scmp.ne.s32.totalorder %s104, %s106
      %p110 = scmp.eq.s32.totalorder %s23, 0
      %p111 = por %p109, %p110
      %p112 = scmp.ne.s32.totalorder %s104, %s106
      %p113 = scmp.eq.s32.totalorder %s28, 1
      %p114 = por %p112, %p113
      %p115 = scmp.ne.s32.totalorder %s106, %s107
      %p116 = scmp.eq.s32.totalorder %s28, 0
      %p117 = por %p115, %p116
      %p118 = scmp.ne.s32.totalorder %s106, %s107
      %p119 = scmp.eq.s32.totalorder %s29, 1
      %p120 = por %p118, %p119
      %p122 = scmp.ne.s32.totalorder %s107, %s121
      %p123 = scmp.eq.s32.totalorder %s29, 0
      %p124 = por %p122, %p123
      %s126 = sadd.s32 %s125, 1
      %p129 = scmp.eq.s32.totalorder %s23, 1
      %p130 = scmp.ne.s32.totalorder %s125, %s127
      %p131 = scmp.eq.s32.totalorder %s23, 0
      %p132 = por %p130, %p131
      %p133 = scmp.ne.s32.totalorder %s125, %s127
      %p134 = scmp.eq.s32.totalorder %s28, 1
      %p135 = por %p133, %p134
      %p136 = scmp.ne.s32.totalorder %s127, %s128
      %p137 = scmp.eq.s32.totalorder %s28, 0
      %p138 = por %p136, %p137
      %p139 = scmp.ne.s32.totalorder %s127, %s128
      %p140 = scmp.eq.s32.totalorder %s29, 1
      %p141 = por %p139, %p140
      %p143 = scmp.ne.s32.totalorder %s128, %s142
      %p144 = scmp.eq.s32.totalorder %s29, 0
      %p145 = por %p143, %p144
      %s147 = sadd.s32 %s146, 1
      %p150 = scmp.eq.s32.totalorder %s23, 1
      %p151 = scmp.ne.s32.totalorder %s146, %s148
      %p152 = scmp.eq.s32.totalorder %s23, 0
      %p153 = por %p151, %p152
      %p154 = scmp.ne.s32.totalorder %s146, %s148
      %p155 = scmp.eq.s32.totalorder %s28, 1
      %p156 = por %p154, %p155
      %p157 = scmp.ne.s32.totalorder %s148, %s149
      %p158 = scmp.eq.s32.totalorder %s28, 0
      %p159 = por %p157, %p158
      %p160 = scmp.ne.s32.totalorder %s148, %s149
      %p161 = scmp.eq.s32.totalorder %s29, 1
      %p162 = por %p160, %p161
      %p164 = scmp.ne.s32.totalorder %s149, %s163
      %p165 = scmp.eq.s32.totalorder %s29, 0
      %p166 = por %p164, %p165
      %s168 = sadd.s32 %s167, 1
      %p171 = scmp.eq.s32.totalorder %s23, 1
      %p172 = scmp.ne.s32.totalorder %s167, %s169
      %p173 = scmp.eq.s32.totalorder %s23, 0
      %p174 = por %p172, %p173
      %p175 = scmp.ne.s32.totalorder %s167, %s169
      %p176 = scmp.eq.s32.totalorder %s28, 1
      %p177 = por %p175, %p176
      %p178 = scmp.ne.s32.totalorder %s169, %s170
      %p179 = scmp.eq.s32.totalorder %s28, 0
      %p180 = por %p178, %p179
      %p181 = scmp.ne.s32.totalorder %s169, %s170
      %p182 = scmp.eq.s32.totalorder %s29, 1
      %p183 = por %p181, %p182
      %p185 = scmp.ne.s32.totalorder %s170, %s184
      %p186 = scmp.eq.s32.totalorder %s29, 0
      %p187 = por %p185, %p186
      %s189 = sadd.s32 %s188, 1
      %p192 = scmp.eq.s32.totalorder %s23, 1
      %p193 = scmp.ne.s32.totalorder %s188, %s190
      %p194 = scmp.eq.s32.totalorder %s23, 0
      %p195 = por %p193, %p194
      %p196 = scmp.ne.s32.totalorder %s188, %s190
      %p197 = scmp.eq.s32.totalorder %s28, 1
      %p198 = por %p196, %p197
      %p199 = scmp.ne.s32.totalorder %s190, %s191
      %p200 = scmp.eq.s32.totalorder %s28, 0
      %p201 = por %p199, %p200
      %p202 = scmp.ne.s32.totalorder %s190, %s191
      %p203 = scmp.eq.s32.totalorder %s29, 1
      %p204 = por %p202, %p203
      %p206 = scmp.ne.s32.totalorder %s191, %s205
      %p207 = scmp.eq.s32.totalorder %s29, 0
      %p208 = por %p206, %p207
      %s210 = sadd.s32 %s209, 1
      %p213 = scmp.eq.s32.totalorder %s23, 1
      %p214 = scmp.ne.s32.totalorder %s209, %s211
      %p215 = scmp.eq.s32.totalorder %s23, 0
      %p216 = por %p214, %p215
      %p217 = scmp.ne.s32.totalorder %s209, %s211
      %p218 = scmp.eq.s32.totalorder %s28, 1
      %p219 = por %p217, %p218
      %p220 = scmp.ne.s32.totalorder %s211, %s212
      %p221 = scmp.eq.s32.totalorder %s28, 0
      %p222 = por %p220, %p221
      %p223 = scmp.ne.s32.totalorder %s211, %s212
      %p224 = scmp.eq.s32.totalorder %s29, 1
      %p225 = por %p223, %p224
      %p227 = scmp.ne.s32.totalorder %s212, %s226
      %p228 = scmp.eq.s32.totalorder %s29, 0
      %p229 = por %p227, %p228
      %s231 = sadd.s32 %s230, 1
      %p234 = scmp.eq.s32.totalorder %s23, 1
      %p235 = scmp.ne.s32.totalorder %s230, %s232
      %p236 = scmp.eq.s32.totalorder %s23, 0
      %p237 = por %p235, %p236
      %p238 = scmp.ne.s32.totalorder %s230, %s232
      %p239 = scmp.eq.s32.totalorder %s28, 1
      %p240 = por %p238, %p239
      %p241 = scmp.ne.s32.totalorder %s232, %s233
      %p242 = scmp.eq.s32.totalorder %s28, 0
      %p243 = por %p241, %p242
      %p244 = scmp.ne.s32.totalorder %s232, %s233
      %p245 = scmp.eq.s32.totalorder %s29, 1
      %p246 = por %p244, %p245
      %p248 = scmp.ne.s32.totalorder %s233, %s247
      %p249 = scmp.eq.s32.totalorder %s29, 0
      %p250 = por %p248, %p249
      %s251 = ssub.s32 %s23, %s30
      %p252 = scmp.eq.s32.totalorder %s251, 0
      %s254 = sadd.s32 %s253, 1
      %s255 = scalar_select %p252, %s253, %s254
      %p258 = pneg %p252
      %p259 = scmp.eq.s32.totalorder %s23, 1
      %p260 = por %p258, %p259
      %p261 = scmp.ne.s32.totalorder %s253, %s256
      %p262 = scmp.eq.s32.totalorder %s23, 0
      %p263 = por %p261, %p262
      %p264 = scmp.ne.s32.totalorder %s253, %s256
      %p265 = scmp.eq.s32.totalorder %s28, 1
      %p266 = por %p264, %p265
      %p267 = scmp.ne.s32.totalorder %s256, %s257
      %p268 = scmp.eq.s32.totalorder %s28, 0
      %p269 = por %p267, %p268
      %p270 = scmp.ne.s32.totalorder %s256, %s257
      %p271 = scmp.eq.s32.totalorder %s29, 1
      %p272 = por %p270, %p271
      %p274 = scmp.ne.s32.totalorder %s257, %s273
      %p275 = scmp.eq.s32.totalorder %s29, 0
      %p276 = por %p274, %p275
      %p277 = scmp.le.s32.totalorder 1, %s23
      %p278 = scmp.lt.s32.totalorder %s23, 3
      %p279 = pnand %p277, %p278
      %p280 = pneg %p279
      // Predicated region
      $region9: #{tpu_custom_call.1} parent=5 // pred_check
        _
      $region10: #{tpu_custom_call.1} parent=5 // pred_check_branch
        %282 = sbr.rel (%p279) target = $region12
      $region11: #{tpu_custom_call.1} parent=5 // pred_region
        %s283 = ssub.s32 %s23, 1
        // Predicated region
        $region13: #{tpu_custom_call.1} parent=11 // pred_check
          %p284 = pneg %p44
        $region14: #{tpu_custom_call.1} parent=11 // pred_check_branch
          %286 = sbr.rel (%p284) target = $region16
        $region15: #{tpu_custom_call.1} parent=11 // pred_region
          %288 = vsyncadd [#allocation3], 0
          %s290 = sshll.u32 %s0, 4
          %s291 = int_to_ptr.hbm [resolvable:$true] %s290
          %s292 = sshll.u32 [#allocation2], 4
          %s293 = int_to_ptr.vmem [resolvable:$true] %s292
          %295 = dma.hbm_to_vmem [thread:$0]  %s291, 64, %s293, [#allocation3]
        $region16: #{tpu_custom_call.1} parent=11 // pred_fallthru
          _
        // Predicated region
        $region17: #{tpu_custom_call.1} parent=11 // pred_check
          %p296 = pneg %p117
        $region18: #{tpu_custom_call.1} parent=11 // pred_check_branch
          %298 = sbr.rel (%p296) target = $region20
        $region19: #{tpu_custom_call.1} parent=11 // pred_region
          _
        $region20: #{tpu_custom_call.1} parent=11 // pred_fallthru
          _
        // Predicated region
        $region21: #{tpu_custom_call.1} parent=11 // pred_check
          %p299 = pneg %p138
        $region22: #{tpu_custom_call.1} parent=11 // pred_check_branch
          %301 = sbr.rel (%p299) target = $region24
        $region23: #{tpu_custom_call.1} parent=11 // pred_region
          _
        $region24: #{tpu_custom_call.1} parent=11 // pred_fallthru
          _
        // Predicated region
        $region25: #{tpu_custom_call.1} parent=11 // pred_check
          %p302 = pneg %p159
        $region26: #{tpu_custom_call.1} parent=11 // pred_check_branch
          %304 = sbr.rel (%p302) target = $region28
        $region27: #{tpu_custom_call.1} parent=11 // pred_region
          _
        $region28: #{tpu_custom_call.1} parent=11 // pred_fallthru
          _
        // Predicated region
        $region29: #{tpu_custom_call.1} parent=11 // pred_check
          %p305 = pneg %p180
        $region30: #{tpu_custom_call.1} parent=11 // pred_check_branch
          %307 = sbr.rel (%p305) target = $region32
        $region31: #{tpu_custom_call.1} parent=11 // pred_region
          _
        $region32: #{tpu_custom_call.1} parent=11 // pred_fallthru
          _
        // Predicated region
        $region33: #{tpu_custom_call.1} parent=11 // pred_check
          %p308 = pneg %p201
        $region34: #{tpu_custom_call.1} parent=11 // pred_check_branch
          %310 = sbr.rel (%p308) target = $region36
        $region35: #{tpu_custom_call.1} parent=11 // pred_region
          _
        $region36: #{tpu_custom_call.1} parent=11 // pred_fallthru
          _
        // Predicated region
        $region37: #{tpu_custom_call.1} parent=11 // pred_check
          %p311 = pneg %p222
        $region38: #{tpu_custom_call.1} parent=11 // pred_check_branch
          %313 = sbr.rel (%p311) target = $region40
        $region39: #{tpu_custom_call.1} parent=11 // pred_region
          _
        $region40: #{tpu_custom_call.1} parent=11 // pred_fallthru
          _
        // Predicated region
        $region41: #{tpu_custom_call.1} parent=11 // pred_check
          %p314 = pneg %p243
        $region42: #{tpu_custom_call.1} parent=11 // pred_check_branch
          %316 = sbr.rel (%p314) target = $region44
        $region43: #{tpu_custom_call.1} parent=11 // pred_region
          _
        $region44: #{tpu_custom_call.1} parent=11 // pred_fallthru
          _
      $region12: #{tpu_custom_call.1} parent=5 // pred_fallthru
        _
      %p317 = scmp.lt.s32.totalorder %s23, 2
      // Predicated region
      $region45: #{tpu_custom_call.1} parent=5 // pred_check
        %p318 = pneg %p317
      $region46: #{tpu_custom_call.1} parent=5 // pred_check_branch
        %320 = sbr.rel (%p318) target = $region48
      $region47: #{tpu_custom_call.1} parent=5 // pred_region
        // Predicated region
        $region49: #{tpu_custom_call.1} parent=47 // pred_check
          %p321 = pneg %p64
        $region50: #{tpu_custom_call.1} parent=47 // pred_check_branch
          %323 = sbr.rel (%p321) target = $region52
        $region51: #{tpu_custom_call.1} parent=47 // pred_region
          %s324 = sand.u32 %s54, 1
          %s325 = scalar_lea.sflag [#allocation6], %s324
          %s326 = sand.u32 %s54, 1
          %s327 = scalar_lea.vmem [#allocation5], %s326
          %329 = vsyncadd %s325, 0
          %s330 = scalar_lea.hbm %s1, %s23
          %s332 = sshll.u32 %s330, 4
          %s333 = int_to_ptr.hbm [resolvable:$true] %s332
          %s334 = sshll.u32 %s327, 4
          %s335 = int_to_ptr.vmem [resolvable:$true] %s334
          %337 = dma.hbm_to_vmem [thread:$0]  %s333, 16, %s335, %s325
        $region52: #{tpu_custom_call.1} parent=47 // pred_fallthru
          _
        // Predicated region
        $region53: #{tpu_custom_call.1} parent=47 // pred_check
          %p338 = pneg %p90
        $region54: #{tpu_custom_call.1} parent=47 // pred_check_branch
          %340 = sbr.rel (%p338) target = $region56
        $region55: #{tpu_custom_call.1} parent=47 // pred_region
          %p341 = scmp.lt.s32.totalorder %s23, 1
          %s342 = scalar_select %p341, %s23, 1
          %s343 = smul.addr %s342, 8
          %s344 = scalar_lea.vmem %s2, %s343
        $region56: #{tpu_custom_call.1} parent=47 // pred_fallthru
          _
      $region48: #{tpu_custom_call.1} parent=5 // pred_fallthru
        _
      %p345 = scmp.le.s32.totalorder 1, %s23
      %p346 = scmp.lt.s32.totalorder %s23, 3
      %p347 = pnand %p345, %p346
      %p348 = pneg %p347
      // Predicated region
      $region57: #{tpu_custom_call.1} parent=5 // pred_check
        _
      $region58: #{tpu_custom_call.1} parent=5 // pred_check_branch
        %350 = sbr.rel (%p347) target = $region60
      $region59: #{tpu_custom_call.1} parent=5 // pred_region
        %s351 = ssub.s32 %s23, 1
        // Predicated region
        $region61: #{tpu_custom_call.1} parent=59 // pred_check
          %p352 = pneg %p44
        $region62: #{tpu_custom_call.1} parent=59 // pred_check_branch
          %354 = sbr.rel (%p352) target = $region64
        $region63: #{tpu_custom_call.1} parent=59 // pred_region
          %356 = dma.done [#allocation3], 64
        $region64: #{tpu_custom_call.1} parent=59 // pred_fallthru
          _
        %s357 = sand.u32 %s57, 1
        %s358 = scalar_lea.sflag [#allocation6], %s357
        %s359 = sand.u32 %s57, 1
        %s360 = scalar_lea.vmem [#allocation5], %s359
        // Predicated region
        $region65: #{tpu_custom_call.1} parent=59 // pred_check
          %p361 = pneg %p70
        $region66: #{tpu_custom_call.1} parent=59 // pred_check_branch
          %363 = sbr.rel (%p361) target = $region68
        $region67: #{tpu_custom_call.1} parent=59 // pred_region
          %365 = dma.done %s358, 16
        $region68: #{tpu_custom_call.1} parent=59 // pred_fallthru
          _
        %p366 = pneg %p44
        %p367 = pneg %p41
        %s368 = sand.u32 %s57, 1
        %s369 = scalar_lea.sflag [#allocation6], %s368
        %s370 = sand.u32 %s57, 1
        %s371 = scalar_lea.vmem [#allocation5], %s370
        %p372 = pneg %p70
        %p373 = pneg %p67
        %p374 = scmp.lt.s32.totalorder %s28, 1
        %s375 = scalar_select %p374, %s28, 1
        %s376 = smul.addr %s375, 8
        %s377 = scalar_lea.vmem %s2, %s376
        %p378 = pneg %p96
        %p379 = pneg %p93
        %p380 = pneg %p117
        %p381 = pneg %p114
        %p382 = pneg %p138
        %p383 = pneg %p135
        %p384 = pneg %p159
        %p385 = pneg %p156
        %p386 = pneg %p180
        %p387 = pneg %p177
        %p388 = pneg %p201
        %p389 = pneg %p198
        %p390 = pneg %p222
        %p391 = pneg %p219
        %p392 = pneg %p243
        %p393 = pneg %p240
        %p394 = pneg %p269
        %p395 = pneg %p266
        %s396 = sand.u32 %s256, 1
        %s397 = scalar_lea.sflag [#allocation4], %s396
        %s398 = sand.u32 %s256, 1
        %s399 = smul.addr %s398, 8
        %s400 = scalar_lea.vmem [#allocation7], %s399
        %p401 = scmp.lt.s32.totalorder %s28, 1
        %s402 = scalar_select %p401, %s28, 1
        %s403 = smul.addr %s402, 8
        %s404 = scalar_lea.vmem %s2, %s403
        %v406 = vld [vmem:[%s360] sm:$0x1]
        %vm407 = vcmp.lt.s32.totalorder %v406, 0
        %vm408 = vcmp.eq.s32.totalorder %v406, 0
        %v409 = vsel %vm408, 0.0, 1.0
        %v410 = vsel %vm407, -1.0, %v409
        %v411 = vsub.s32 0, %v406
        %v412 = vsel %vm407, %v411, %v406
        %v413 = vlaneseq
        %v414 = vand.u32 %v413, 127
        %v415 = vperm.slane %v412, 0
        %v416 = vlaneseq
        %v417 = vshrl.u32 %v416, 7
        %419 = vset.pattern.permute.xlu0 %v417
        %420 = vperm.xlu0 %419, %v415
        %v421 = vpop.permute.xlu0 %420
        %v422 = vlaneseq
        %v423 = vshrl.u32 %v422, 7
        %v424 = vadd.s32 %v423, 8
        %425 = vset.pattern.permute.xlu0 %v424
        %426 = vperm.xlu0 %425, %v415
        %v427 = vpop.permute.xlu0 %426
        %vm428 = vcmp.eq.s32.totalorder %v421, %v414
        %vm429 = vcmp.eq.s32.totalorder %v427, %v414
        %v430 = vperm.slane %v410, 0
        %v431 = vlaneseq
        %v432 = vshrl.u32 %v431, 7
        %434 = vset.pattern.permute.xlu0 %v432
        %435 = vperm.xlu0 %434, %v430
        %v436 = vpop.permute.xlu0 %435
        %v437 = vlaneseq
        %v438 = vshrl.u32 %v437, 7
        %v439 = vadd.s32 %v438, 8
        %440 = vset.pattern.permute.xlu0 %v439
        %441 = vperm.xlu0 %440, %v430
        %v442 = vpop.permute.xlu0 %441
        %v443 = vsel %vm428, %v436, 0.0
        %v444 = vsel %vm429, %v442, 0.0
        %v445 = vpack.c.bf16 %v443, %v443
        %v446 = vpack.c.bf16 %v444, %v444
        %v447 = vld [vmem:[#allocation2] sm:$0xf]
        %v450 = vunpack.c.l.b16 %v445
        %v451 = vunpack.c.l.b16 %v446
        %v452 = vpack.c.b16 %v451, %v450
        %vm454 = vcmask 130048
        %v456 = vsel %vm454, %v447, 0
        %458 = vmatpush.bf16.msra.mxu0 0
        %459 = vmatpush.bf16.msra.mxu0 0
        %460 = vmatpush.bf16.msra.mxu0 0
        %461 = vmatpush.bf16.msra.mxu0 0
        %462 = vmatpush.bf16.msra.mxu0 0
        %463 = vmatpush.bf16.msra.mxu0 0
        %464 = vmatpush.bf16.msra.mxu0 0
        %465 = vmatpush.bf16.msra.mxu0 %v452
        %466 = vmatmul.bf16.gmra.mxu0 %v456
        %v467 = vpop.f32.mrf.mxu0
        %v468 = vadd.f32 0.0, %v467
        %v469 = vpop.f32.mrf.mxu0
        %470 = vdwg.mxu0
        %v471 = vld [vmem:[%s3] sm:$0xff]
        %v472 = vld [vmem:[%s3 + $0x8] sm:$0xf]
        %v473 = vpack.c.bf16 %v471, %v471
        %v474 = vpack.c.bf16 %v472, %v472
        %v475 = vunpack.c.l.bf16 %v473
        %v476 = vunpack.c.l.bf16 %v474
        %v477 = vsub.f32 %v471, %v475
        %v478 = vsub.f32 %v472, %v476
        %v479 = vpack.c.bf16 %v478, %v477
        %v480 = vpack.c.bf16 %v468, %v468
        %vm481 = vcmask 97280
        %v483 = vsel %vm481, %v480, 0
        %vm485 = vcmask 1045504
        %v487 = vsel %vm485, %v479, 0
        %489 = vmatpush.bf16.msra.mxu0 0
        %490 = vmatpush.bf16.msra.mxu0 0
        %491 = vmatpush.bf16.msra.mxu0 0
        %492 = vmatpush.bf16.msra.mxu0 0
        %493 = vmatpush.bf16.msra.mxu0 0
        %494 = vmatpush.bf16.msra.mxu0 0
        %495 = vmatpush.bf16.msra.mxu0 0
        %496 = vmatpush.bf16.msra.mxu0 %v487
        %497 = vmatmul.bf16.gmra.mxu0 %v483
        %v498 = vpop.f32.mrf.mxu0
        %v499 = vadd.f32 0.0, %v498
        %v500 = vpop.f32.mrf.mxu0
        %501 = vdwg.mxu0
        %v504 = vunpack.c.l.b16 %v473
        %v505 = vunpack.c.l.b16 %v474
        %v506 = vpack.c.b16 %v505, %v504
        %v508 = vsel %vm485, %v506, 0
        %510 = vmatpush.bf16.msra.mxu0 0
        %511 = vmatpush.bf16.msra.mxu0 0
        %512 = vmatpush.bf16.msra.mxu0 0
        %513 = vmatpush.bf16.msra.mxu0 0
        %514 = vmatpush.bf16.msra.mxu0 0
        %515 = vmatpush.bf16.msra.mxu0 0
        %516 = vmatpush.bf16.msra.mxu0 0
        %517 = vmatpush.bf16.msra.mxu0 %v508
        %518 = vmatmul.bf16.gmra.mxu0 %v483
        %v519 = vpop.f32.mrf.mxu0
        %v520 = vadd.f32 %v499, %v519
        %v521 = vpop.f32.mrf.mxu0
        %522 = vdwg.mxu0
        %v523 = vld [vmem:[%s404] sm:$0xff]
        %v524 = vld [vmem:[%s4] sm:$0xff]
        %v525 = vld [vmem:[%s4 + $0x8] sm:$0xff]
        %v526 = vld [vmem:[%s4 + $0x10] sm:$0xff]
        %v527 = vld [vmem:[%s4 + $0x18] sm:$0xff]
        %v528 = vpack.c.bf16 %v520, %v520
        %v529 = vunpack.c.l.bf16 %v528
        %v530 = vsub.f32 %v520, %v529
        %v531 = vpack.c.bf16 %v530, %v530
        %v532 = vpack.c.bf16 %v524, %v524
        %v533 = vpack.c.bf16 %v525, %v525
        %v534 = vpack.c.bf16 %v526, %v526
        %v535 = vpack.c.bf16 %v527, %v527
        %v536 = vunpack.c.l.bf16 %v532
        %v537 = vunpack.c.l.bf16 %v533
        %v538 = vunpack.c.l.bf16 %v534
        %v539 = vunpack.c.l.bf16 %v535
        %v540 = vsub.f32 %v524, %v536
        %v541 = vsub.f32 %v525, %v537
        %v542 = vsub.f32 %v526, %v538
        %v543 = vsub.f32 %v527, %v539
        %v544 = vpack.c.bf16 %v541, %v540
        %v545 = vpack.c.bf16 %v543, %v542
        %vm546 = vcmask 261120
        %v548 = vsel %vm546, %v528, 0
        %550 = vmatpush.bf16.msra.mxu0 0
        %551 = vmatpush.bf16.msra.mxu0 0
        %552 = vmatpush.bf16.msra.mxu0 0
        %553 = vmatpush.bf16.msra.mxu0 0
        %554 = vmatpush.bf16.msra.mxu0 0
        %555 = vmatpush.bf16.msra.mxu0 0
        %556 = vmatpush.bf16.msra.mxu0 %v545
        %557 = vmatpush.bf16.msra.mxu0 %v544
        %558 = vmatmul.bf16.gmra.mxu0 %v548
        %v559 = vpop.f32.mrf.mxu0
        %v560 = vadd.f32 0.0, %v559
        %v561 = vpop.f32.mrf.mxu0
        %562 = vdwg.mxu0
        %v567 = vunpack.c.l.b16 %v532
        %v568 = vunpack.c.l.b16 %v533
        %v569 = vunpack.c.l.b16 %v534
        %v570 = vunpack.c.l.b16 %v535
        %v571 = vpack.c.b16 %v568, %v567
        %v572 = vpack.c.b16 %v570, %v569
        %575 = vmatpush.bf16.msra.mxu0 0
        %576 = vmatpush.bf16.msra.mxu0 0
        %577 = vmatpush.bf16.msra.mxu0 0
        %578 = vmatpush.bf16.msra.mxu0 0
        %579 = vmatpush.bf16.msra.mxu0 0
        %580 = vmatpush.bf16.msra.mxu0 0
        %581 = vmatpush.bf16.msra.mxu0 %v572
        %582 = vmatpush.bf16.msra.mxu0 %v571
        %583 = vmatmul.bf16.gmra.mxu0 %v548
        %v584 = vpop.f32.mrf.mxu0
        %v585 = vadd.f32 %v560, %v584
        %v586 = vpop.f32.mrf.mxu0
        %587 = vdwg.mxu0
        %v589 = vsel %vm546, %v531, 0
        %591 = vmatpush.bf16.msra.mxu0 0
        %592 = vmatpush.bf16.msra.mxu0 0
        %593 = vmatpush.bf16.msra.mxu0 0
        %594 = vmatpush.bf16.msra.mxu0 0
        %595 = vmatpush.bf16.msra.mxu0 0
        %596 = vmatpush.bf16.msra.mxu0 0
        %597 = vmatpush.bf16.msra.mxu0 %v572
        %598 = vmatpush.bf16.msra.mxu0 %v571
        %599 = vmatmul.bf16.gmra.mxu0 %v589
        %v600 = vpop.f32.mrf.mxu0
        %v601 = vadd.f32 0.0, %v600
        %v602 = vpop.f32.mrf.mxu0
        %603 = vdwg.mxu0
        %v604 = vadd.f32 %v585, %v601
        %v605 = vld [vmem:[%s4 + $0x20] sm:$0xff]
        %v606 = vld [vmem:[%s4 + $0x28] sm:$0xff]
        %v607 = vld [vmem:[%s4 + $0x30] sm:$0xff]
        %v608 = vld [vmem:[%s4 + $0x38] sm:$0xff]
        %v609 = vpack.c.bf16 %v523, %v523
        %v610 = vunpack.c.l.bf16 %v609
        %v611 = vsub.f32 %v523, %v610
        %v612 = vpack.c.bf16 %v611, %v611
        %v613 = vpack.c.bf16 %v605, %v605
        %v614 = vpack.c.bf16 %v606, %v606
        %v615 = vpack.c.bf16 %v607, %v607
        %v616 = vpack.c.bf16 %v608, %v608
        %v617 = vunpack.c.l.bf16 %v613
        %v618 = vunpack.c.l.bf16 %v614
        %v619 = vunpack.c.l.bf16 %v615
        %v620 = vunpack.c.l.bf16 %v616
        %v621 = vsub.f32 %v605, %v617
        %v622 = vsub.f32 %v606, %v618
        %v623 = vsub.f32 %v607, %v619
        %v624 = vsub.f32 %v608, %v620
        %v625 = vpack.c.bf16 %v622, %v621
        %v626 = vpack.c.bf16 %v624, %v623
        %v628 = vsel %vm546, %v609, 0
        %630 = vmatpush.bf16.msra.mxu0 0
        %631 = vmatpush.bf16.msra.mxu0 0
        %632 = vmatpush.bf16.msra.mxu0 0
        %633 = vmatpush.bf16.msra.mxu0 0
        %634 = vmatpush.bf16.msra.mxu0 0
        %635 = vmatpush.bf16.msra.mxu0 0
        %636 = vmatpush.bf16.msra.mxu0 %v626
        %637 = vmatpush.bf16.msra.mxu0 %v625
        %638 = vmatmul.bf16.gmra.mxu0 %v628
        %v639 = vpop.f32.mrf.mxu0
        %v640 = vadd.f32 0.0, %v639
        %v641 = vpop.f32.mrf.mxu0
        %642 = vdwg.mxu0
        %v647 = vunpack.c.l.b16 %v613
        %v648 = vunpack.c.l.b16 %v614
        %v649 = vunpack.c.l.b16 %v615
        %v650 = vunpack.c.l.b16 %v616
        %v651 = vpack.c.b16 %v648, %v647
        %v652 = vpack.c.b16 %v650, %v649
        %655 = vmatpush.bf16.msra.mxu0 0
        %656 = vmatpush.bf16.msra.mxu0 0
        %657 = vmatpush.bf16.msra.mxu0 0
        %658 = vmatpush.bf16.msra.mxu0 0
        %659 = vmatpush.bf16.msra.mxu0 0
        %660 = vmatpush.bf16.msra.mxu0 0
        %661 = vmatpush.bf16.msra.mxu0 %v652
        %662 = vmatpush.bf16.msra.mxu0 %v651
        %663 = vmatmul.bf16.gmra.mxu0 %v628
        %v664 = vpop.f32.mrf.mxu0
        %v665 = vadd.f32 %v640, %v664
        %v666 = vpop.f32.mrf.mxu0
        %667 = vdwg.mxu0
        %v669 = vsel %vm546, %v612, 0
        %671 = vmatpush.bf16.msra.mxu0 0
        %672 = vmatpush.bf16.msra.mxu0 0
        %673 = vmatpush.bf16.msra.mxu0 0
        %674 = vmatpush.bf16.msra.mxu0 0
        %675 = vmatpush.bf16.msra.mxu0 0
        %676 = vmatpush.bf16.msra.mxu0 0
        %677 = vmatpush.bf16.msra.mxu0 %v652
        %678 = vmatpush.bf16.msra.mxu0 %v651
        %679 = vmatmul.bf16.gmra.mxu0 %v669
        %v680 = vpop.f32.mrf.mxu0
        %v681 = vadd.f32 0.0, %v680
        %v682 = vpop.f32.mrf.mxu0
        %683 = vdwg.mxu0
        %v684 = vadd.f32 %v665, %v681
        %v685 = vadd.f32 %v604, %v684
        %v686 = vld [vmem:[%s5] sm:$0x1]
        %v688 = vperm.slane %v686, 0
        %v690 = vadd.f32 %v685, %v688
        %v691 = vmax.f32 %v690, 0.0
        %v692 = vld [vmem:[%s6] sm:$0xff]
        %v693 = vld [vmem:[%s6 + $0x8] sm:$0xff]
        %v694 = vld [vmem:[%s6 + $0x10] sm:$0xff]
        %v695 = vld [vmem:[%s6 + $0x18] sm:$0xff]
        %v696 = vld [vmem:[%s6 + $0x20] sm:$0xff]
        %v697 = vld [vmem:[%s6 + $0x28] sm:$0xff]
        %v698 = vld [vmem:[%s6 + $0x30] sm:$0xff]
        %v699 = vld [vmem:[%s6 + $0x38] sm:$0xff]
        %v700 = vpack.c.bf16 %v691, %v691
        %v701 = vunpack.c.l.bf16 %v700
        %v702 = vsub.f32 %v691, %v701
        %v703 = vpack.c.bf16 %v702, %v702
        %v704 = vpack.c.bf16 %v692, %v692
        %v705 = vpack.c.bf16 %v693, %v693
        %v706 = vpack.c.bf16 %v694, %v694
        %v707 = vpack.c.bf16 %v695, %v695
        %v708 = vpack.c.bf16 %v696, %v696
        %v709 = vpack.c.bf16 %v697, %v697
        %v710 = vpack.c.bf16 %v698, %v698
        %v711 = vpack.c.bf16 %v699, %v699
        %v712 = vunpack.c.l.bf16 %v704
        %v713 = vunpack.c.l.bf16 %v705
        %v714 = vunpack.c.l.bf16 %v706
        %v715 = vunpack.c.l.bf16 %v707
        %v716 = vunpack.c.l.bf16 %v708
        %v717 = vunpack.c.l.bf16 %v709
        %v718 = vunpack.c.l.bf16 %v710
        %v719 = vunpack.c.l.bf16 %v711
        %v720 = vsub.f32 %v692, %v712
        %v721 = vsub.f32 %v693, %v713
        %v722 = vsub.f32 %v694, %v714
        %v723 = vsub.f32 %v695, %v715
        %v724 = vsub.f32 %v696, %v716
        %v725 = vsub.f32 %v697, %v717
        %v726 = vsub.f32 %v698, %v718
        %v727 = vsub.f32 %v699, %v719
        %v728 = vpack.c.bf16 %v721, %v720
        %v729 = vpack.c.bf16 %v723, %v722
        %v730 = vpack.c.bf16 %v725, %v724
        %v731 = vpack.c.bf16 %v727, %v726
        %vm732 = vcmask 523264
        %v734 = vsel %vm732, %v700, 0
        %736 = vmatpush.bf16.msra.mxu0 0
        %737 = vmatpush.bf16.msra.mxu0 0
        %738 = vmatpush.bf16.msra.mxu0 0
        %739 = vmatpush.bf16.msra.mxu0 0
        %740 = vmatpush.bf16.msra.mxu0 %v731
        %741 = vmatpush.bf16.msra.mxu0 %v730
        %742 = vmatpush.bf16.msra.mxu0 %v729
        %743 = vmatpush.bf16.msra.mxu0 %v728
        %744 = vmatmul.bf16.gmra.mxu0 %v734
        %v745 = vpop.f32.mrf.mxu0
        %v746 = vadd.f32 0.0, %v745
        %v747 = vpop.f32.mrf.mxu0
        %748 = vdwg.mxu0
        %v757 = vunpack.c.l.b16 %v704
        %v758 = vunpack.c.l.b16 %v705
        %v759 = vunpack.c.l.b16 %v706
        %v760 = vunpack.c.l.b16 %v707
        %v761 = vunpack.c.l.b16 %v708
        %v762 = vunpack.c.l.b16 %v709
        %v763 = vunpack.c.l.b16 %v710
        %v764 = vunpack.c.l.b16 %v711
        %v765 = vpack.c.b16 %v758, %v757
        %v766 = vpack.c.b16 %v760, %v759
        %v767 = vpack.c.b16 %v762, %v761
        %v768 = vpack.c.b16 %v764, %v763
        %773 = vmatpush.bf16.msra.mxu0 0
        %774 = vmatpush.bf16.msra.mxu0 0
        %775 = vmatpush.bf16.msra.mxu0 0
        %776 = vmatpush.bf16.msra.mxu0 0
        %777 = vmatpush.bf16.msra.mxu0 %v768
        %778 = vmatpush.bf16.msra.mxu0 %v767
        %779 = vmatpush.bf16.msra.mxu0 %v766
        %780 = vmatpush.bf16.msra.mxu0 %v765
        %781 = vmatmul.bf16.gmra.mxu0 %v734
        %v782 = vpop.f32.mrf.mxu0
        %v783 = vadd.f32 %v746, %v782
        %v784 = vpop.f32.mrf.mxu0
        %785 = vdwg.mxu0
        %v787 = vsel %vm732, %v703, 0
        %789 = vmatpush.bf16.msra.mxu0 0
        %790 = vmatpush.bf16.msra.mxu0 0
        %791 = vmatpush.bf16.msra.mxu0 0
        %792 = vmatpush.bf16.msra.mxu0 0
        %793 = vmatpush.bf16.msra.mxu0 %v768
        %794 = vmatpush.bf16.msra.mxu0 %v767
        %795 = vmatpush.bf16.msra.mxu0 %v766
        %796 = vmatpush.bf16.msra.mxu0 %v765
        %797 = vmatmul.bf16.gmra.mxu0 %v787
        %v798 = vpop.f32.mrf.mxu0
        %v799 = vadd.f32 0.0, %v798
        %v800 = vpop.f32.mrf.mxu0
        %801 = vdwg.mxu0
        %v802 = vadd.f32 %v783, %v799
        %v803 = vld [vmem:[%s7] sm:$0x1]
        %v805 = vperm.slane %v803, 0
        %v807 = vadd.f32 %v802, %v805
        %v808 = vmax.f32 %v807, 0.0
        %v809 = vld [vmem:[%s8] sm:$0xff]
        %v810 = vld [vmem:[%s8 + $0x8] sm:$0xff]
        %v811 = vld [vmem:[%s8 + $0x10] sm:$0xff]
        %v812 = vld [vmem:[%s8 + $0x18] sm:$0xff]
        %v813 = vld [vmem:[%s8 + $0x20] sm:$0xff]
        %v814 = vld [vmem:[%s8 + $0x28] sm:$0xff]
        %v815 = vld [vmem:[%s8 + $0x30] sm:$0xff]
        %v816 = vld [vmem:[%s8 + $0x38] sm:$0xff]
        %v817 = vld [vmem:[%s8 + $0x40] sm:$0xff]
        %v818 = vld [vmem:[%s8 + $0x48] sm:$0xff]
        %v819 = vld [vmem:[%s8 + $0x50] sm:$0xff]
        %v820 = vld [vmem:[%s8 + $0x58] sm:$0xff]
        %v821 = vld [vmem:[%s8 + $0x60] sm:$0xff]
        %v822 = vld [vmem:[%s8 + $0x68] sm:$0xff]
        %v823 = vld [vmem:[%s8 + $0x70] sm:$0xff]
        %v824 = vld [vmem:[%s8 + $0x78] sm:$0xff]
        %v825 = vpack.c.bf16 %v808, %v808
        %v826 = vunpack.c.l.bf16 %v825
        %v827 = vsub.f32 %v808, %v826
        %v828 = vpack.c.bf16 %v827, %v827
        %v829 = vpack.c.bf16 %v809, %v809
        %v830 = vpack.c.bf16 %v810, %v810
        %v831 = vpack.c.bf16 %v811, %v811
        %v832 = vpack.c.bf16 %v812, %v812
        %v833 = vpack.c.bf16 %v813, %v813
        %v834 = vpack.c.bf16 %v814, %v814
        %v835 = vpack.c.bf16 %v815, %v815
        %v836 = vpack.c.bf16 %v816, %v816
        %v837 = vpack.c.bf16 %v817, %v817
        %v838 = vpack.c.bf16 %v818, %v818
        %v839 = vpack.c.bf16 %v819, %v819
        %v840 = vpack.c.bf16 %v820, %v820
        %v841 = vpack.c.bf16 %v821, %v821
        %v842 = vpack.c.bf16 %v822, %v822
        %v843 = vpack.c.bf16 %v823, %v823
        %v844 = vpack.c.bf16 %v824, %v824
        %v845 = vunpack.c.l.bf16 %v829
        %v846 = vunpack.c.l.bf16 %v830
        %v847 = vunpack.c.l.bf16 %v831
        %v848 = vunpack.c.l.bf16 %v832
        %v849 = vunpack.c.l.bf16 %v833
        %v850 = vunpack.c.l.bf16 %v834
        %v851 = vunpack.c.l.bf16 %v835
        %v852 = vunpack.c.l.bf16 %v836
        %v853 = vunpack.c.l.bf16 %v837
        %v854 = vunpack.c.l.bf16 %v838
        %v855 = vunpack.c.l.bf16 %v839
        %v856 = vunpack.c.l.bf16 %v840
        %v857 = vunpack.c.l.bf16 %v841
        %v858 = vunpack.c.l.bf16 %v842
        %v859 = vunpack.c.l.bf16 %v843
        %v860 = vunpack.c.l.bf16 %v844
        %v861 = vsub.f32 %v809, %v845
        %v862 = vsub.f32 %v810, %v846
        %v863 = vsub.f32 %v811, %v847
        %v864 = vsub.f32 %v812, %v848
        %v865 = vsub.f32 %v813, %v849
        %v866 = vsub.f32 %v814, %v850
        %v867 = vsub.f32 %v815, %v851
        %v868 = vsub.f32 %v816, %v852
        %v869 = vsub.f32 %v817, %v853
        %v870 = vsub.f32 %v818, %v854
        %v871 = vsub.f32 %v819, %v855
        %v872 = vsub.f32 %v820, %v856
        %v873 = vsub.f32 %v821, %v857
        %v874 = vsub.f32 %v822, %v858
        %v875 = vsub.f32 %v823, %v859
        %v876 = vsub.f32 %v824, %v860
        %v877 = vpack.c.bf16 %v862, %v861
        %v878 = vpack.c.bf16 %v864, %v863
        %v879 = vpack.c.bf16 %v866, %v865
        %v880 = vpack.c.bf16 %v868, %v867
        %v881 = vpack.c.bf16 %v870, %v869
        %v882 = vpack.c.bf16 %v872, %v871
        %v883 = vpack.c.bf16 %v874, %v873
        %v884 = vpack.c.bf16 %v876, %v875
        %885 = vmatpush.bf16.msra.mxu0 %v884
        %886 = vmatpush.bf16.msra.mxu0 %v883
        %887 = vmatpush.bf16.msra.mxu0 %v882
        %888 = vmatpush.bf16.msra.mxu0 %v881
        %889 = vmatpush.bf16.msra.mxu0 %v880
        %890 = vmatpush.bf16.msra.mxu0 %v879
        %891 = vmatpush.bf16.msra.mxu0 %v878
        %892 = vmatpush.bf16.msra.mxu0 %v877
        %893 = vmatmul.bf16.gmra.mxu0 %v825
        %v894 = vpop.f32.mrf.mxu0
        %v895 = vadd.f32 0.0, %v894
        %v896 = vpop.f32.mrf.mxu0
        %897 = vdwg.mxu0
        %v914 = vunpack.c.l.b16 %v829
        %v915 = vunpack.c.l.b16 %v830
        %v916 = vunpack.c.l.b16 %v831
        %v917 = vunpack.c.l.b16 %v832
        %v918 = vunpack.c.l.b16 %v833
        %v919 = vunpack.c.l.b16 %v834
        %v920 = vunpack.c.l.b16 %v835
        %v921 = vunpack.c.l.b16 %v836
        %v922 = vunpack.c.l.b16 %v837
        %v923 = vunpack.c.l.b16 %v838
        %v924 = vunpack.c.l.b16 %v839
        %v925 = vunpack.c.l.b16 %v840
        %v926 = vunpack.c.l.b16 %v841
        %v927 = vunpack.c.l.b16 %v842
        %v928 = vunpack.c.l.b16 %v843
        %v929 = vunpack.c.l.b16 %v844
        %v930 = vpack.c.b16 %v915, %v914
        %v931 = vpack.c.b16 %v917, %v916
        %v932 = vpack.c.b16 %v919, %v918
        %v933 = vpack.c.b16 %v921, %v920
        %v934 = vpack.c.b16 %v923, %v922
        %v935 = vpack.c.b16 %v925, %v924
        %v936 = vpack.c.b16 %v927, %v926
        %v937 = vpack.c.b16 %v929, %v928
        %946 = vmatpush.bf16.msra.mxu0 %v937
        %947 = vmatpush.bf16.msra.mxu0 %v936
        %948 = vmatpush.bf16.msra.mxu0 %v935
        %949 = vmatpush.bf16.msra.mxu0 %v934
        %950 = vmatpush.bf16.msra.mxu0 %v933
        %951 = vmatpush.bf16.msra.mxu0 %v932
        %952 = vmatpush.bf16.msra.mxu0 %v931
        %953 = vmatpush.bf16.msra.mxu0 %v930
        %954 = vmatmul.bf16.gmra.mxu0 %v825
        %v955 = vpop.f32.mrf.mxu0
        %v956 = vadd.f32 %v895, %v955
        %v957 = vpop.f32.mrf.mxu0
        %958 = vdwg.mxu0
        %959 = vmatpush.bf16.msra.mxu0 %v937
        %960 = vmatpush.bf16.msra.mxu0 %v936
        %961 = vmatpush.bf16.msra.mxu0 %v935
        %962 = vmatpush.bf16.msra.mxu0 %v934
        %963 = vmatpush.bf16.msra.mxu0 %v933
        %964 = vmatpush.bf16.msra.mxu0 %v932
        %965 = vmatpush.bf16.msra.mxu0 %v931
        %966 = vmatpush.bf16.msra.mxu0 %v930
        %967 = vmatmul.bf16.gmra.mxu0 %v828
        %v968 = vpop.f32.mrf.mxu0
        %v969 = vadd.f32 0.0, %v968
        %v970 = vpop.f32.mrf.mxu0
        %971 = vdwg.mxu0
        %v972 = vadd.f32 %v956, %v969
        %v973 = vld [vmem:[%s9] sm:$0x1]
        %v975 = vperm.slane %v973, 0
        %v977 = vadd.f32 %v972, %v975
        %978 = vst.msk [vmem:[%s400] sm:$0xff] %vm546, %v977
        %s979 = sand.u32 %s256, 1
        %s980 = scalar_lea.sflag [#allocation4], %s979
        %s981 = sand.u32 %s256, 1
        %s982 = smul.addr %s981, 8
        %s983 = scalar_lea.vmem [#allocation7], %s982
        // Predicated region
        $region69: #{tpu_custom_call.1} parent=59 // pred_check
          %p984 = pneg %p266
        $region70: #{tpu_custom_call.1} parent=59 // pred_check_branch
          %986 = sbr.rel (%p984) target = $region72
        $region71: #{tpu_custom_call.1} parent=59 // pred_region
          %988 = vsyncadd %s980, 0
          %s989 = smul.addr %s28, 8
          %s990 = scalar_lea.hbm %s10, %s989
          %s992 = sshll.u32 %s983, 4
          %s993 = int_to_ptr.vmem [resolvable:$true] %s992
          %s994 = sshll.u32 %s990, 4
          %s995 = int_to_ptr.hbm [resolvable:$true] %s994
          %997 = dma.vmem_to_hbm [thread:$0]  %s993, 128, %s995, %s980
        $region72: #{tpu_custom_call.1} parent=59 // pred_fallthru
          _
      $region60: #{tpu_custom_call.1} parent=5 // pred_fallthru
        _
      %p998 = scmp.le.s32.totalorder 2, %s23
      // Predicated region
      $region73: #{tpu_custom_call.1} parent=5 // pred_check
        %p999 = pneg %p998
      $region74: #{tpu_custom_call.1} parent=5 // pred_check_branch
        %1001 = sbr.rel (%p999) target = $region76
      $region75: #{tpu_custom_call.1} parent=5 // pred_region
        %s1002 = ssub.s32 %s23, 2
        // Predicated region
        $region77: #{tpu_custom_call.1} parent=75 // pred_check
          %p1003 = pneg %p272
        $region78: #{tpu_custom_call.1} parent=75 // pred_check_branch
          %1005 = sbr.rel (%p1003) target = $region80
        $region79: #{tpu_custom_call.1} parent=75 // pred_region
          %s1006 = sand.u32 %s257, 1
          %s1007 = scalar_lea.sflag [#allocation4], %s1006
          %s1008 = sand.u32 %s257, 1
          %s1009 = smul.addr %s1008, 8
          %s1010 = scalar_lea.vmem [#allocation7], %s1009
          %1012 = dma.done %s1007, 128
        $region80: #{tpu_custom_call.1} parent=75 // pred_fallthru
          _
      $region76: #{tpu_custom_call.1} parent=5 // pred_fallthru
        _
    $region6: #{tpu_custom_call.1} parent=1 // loop_footer
      %s27 = sadd.s32 1, %s23
    $region7: #{tpu_custom_call.1} parent=1 // loop_footer_branch
      %22 = sbr.rel target = $region3
    $region8: #{tpu_custom_call.1} parent=1 // loop_exit
      _
    %1013 = vsyncpa [#allocation3], 1
    %s1014 = scalar_lea.sflag [#allocation3], 1
    %1015 = vsyncpa %s1014, 1
    %1016 = vsyncpa [#allocation6], 1
    %s1017 = scalar_lea.sflag [#allocation6], 1
    %1018 = vsyncpa %s1017, 1
    %1019 = vsyncpa [#allocation4], 1
    %s1020 = scalar_lea.sflag [#allocation4], 1
    %1021 = vsyncpa %s1020, 1

</llo_original>
